<compile_context>
chip_gen: v7x
topology: tpu7x:2x2x1
jax: 0.10.0
libtpu: 0.0.40
codegen_flags: <defaults>
</compile_context>

<pallas_src>
import math
from functools import partial

import numpy as np
import jax
import jax.numpy as jnp
from jax.experimental import pallas as pl
from jax.experimental.pallas import tpu as pltpu

_BF = jnp.bfloat16


# ----------------------------- kernel helpers --------------------------------

def _gelu_exact(y):
    # torch.nn.GELU default (erf form)
    return 0.5 * y * (1.0 + jax.lax.erf(y * (1.0 / math.sqrt(2.0))))


def _ln_rows(x, g, b, eps):
    mean = jnp.mean(x, axis=-1, keepdims=True)
    xc = x - mean
    var = jnp.mean(xc * xc, axis=-1, keepdims=True)
    return xc * jax.lax.rsqrt(var + eps) * g + b


def _mm(a, w):
    """bf16-operand matmul with f32 accumulation (MXU-friendly on v5e/v6e/v7x)."""
    return jnp.dot(a.astype(_BF), w.astype(_BF), preferred_element_type=jnp.float32)


def _block_step(x, num_heads, n1g, n1b, qkv_w, qkv_b, proj_w, proj_b,
                n2g, n2b, fc1_w, fc1_b, fc2_w, fc2_b, eps):
    """One ViT block on a (S, D) f32 residual stream.
       Fused QKV (single (S,D)@(D,3D) matmul) and single output projection."""
    S, D = x.shape
    dh = D // num_heads
    scale = dh ** -0.5

    h = _ln_rows(x, n1g, n1b, eps)
    qkv = _mm(h, qkv_w) + qkv_b                               # (S, 3D)

    # per-head attention from static lane slices of the fused QKV activation.
    # heads are few and S/dh small here, so the unrolled loop keeps only a couple
    # of live vregs per head (no spill risk at these sizes).
    heads = []
    for hd in range(num_heads):
        q = qkv[:, hd * dh:(hd + 1) * dh]
        k = qkv[:, D + hd * dh:D + (hd + 1) * dh]
        v = qkv[:, 2 * D + hd * dh:2 * D + (hd + 1) * dh]
        s = jax.lax.dot_general(q.astype(_BF), k.astype(_BF),
                                (((1,), (1,)), ((), ())),
                                preferred_element_type=jnp.float32) * scale
        s = s - jnp.max(s, axis=-1, keepdims=True)
        p = jnp.exp(s)
        p = p / jnp.sum(p, axis=-1, keepdims=True)            # exact division
        heads.append(jnp.dot(p.astype(_BF), v.astype(_BF),
                             preferred_element_type=jnp.float32))  # (S, dh)
    attn = jnp.concatenate(heads, axis=-1)                    # (S, D)

    x = x + _mm(attn, proj_w) + proj_b                        # single proj matmul

    h2 = _ln_rows(x, n2g, n2b, eps)
    h2 = _gelu_exact(_mm(h2, fc1_w) + fc1_b)
    return x + _mm(h2, fc2_w) + fc2_b


# ----------------------------- fused stack kernels ----------------------------

def _encoder_stack_kernel(x_ref, n1g, n1b, qkvw, qkvb, pw, pb, n2g, n2b,
                          f1w, f1b, f2w, f2b, fng, fnb, o_ref, x_scr,
                          *, num_heads, eps):
    """grid = (batch, depth). Residual stream lives in x_scr across the depth axis.
       Final encoder LayerNorm fused at the last layer step."""
    l = pl.program_id(1)

    @pl.when(l == 0)
    def _():
        x_scr[...] = x_ref[0].astype(jnp.float32)

    x = _block_step(x_scr[...], num_heads,
                    n1g[0], n1b[0], qkvw[0], qkvb[0], pw[0], pb[0],
                    n2g[0], n2b[0], f1w[0], f1b[0], f2w[0], f2b[0], eps)
    x_scr[...] = x

    @pl.when(l == pl.num_programs(1) - 1)
    def _():
        o_ref[0] = _ln_rows(x, fng[...], fnb[...], eps).astype(o_ref.dtype)


def _decoder_stack_kernel(x_ref, pos_ref, n1g, n1b, qkvw, qkvb, pw, pb, n2g, n2b,
                          f1w, f1b, f2w, f2b, fng, fnb, predw, predb,
                          o_ref, x_scr, *, num_heads, eps):
    """Like the encoder stack, plus pos-embed add at layer 0 and fused
       decoder_norm + decoder_pred at the last layer step."""
    l = pl.program_id(1)

    @pl.when(l == 0)
    def _():
        x_scr[...] = x_ref[0].astype(jnp.float32) + pos_ref[0]

    x = _block_step(x_scr[...], num_heads,
                    n1g[0], n1b[0], qkvw[0], qkvb[0], pw[0], pb[0],
                    n2g[0], n2b[0], f1w[0], f1b[0], f2w[0], f2b[0], eps)
    x_scr[...] = x

    @pl.when(l == pl.num_programs(1) - 1)
    def _():
        h = _ln_rows(x, fng[...], fnb[...], eps)
        o_ref[0] = (_mm(h, predw[...]) + predb[...]).astype(o_ref.dtype)


_BLOCK_KEYS = ["n1g", "n1b", "qkv_w", "qkv_b", "proj_w", "proj_b",
               "n2g", "n2b", "fc1_w", "fc1_b", "fc2_w", "fc2_b"]


def _wspec(a):
    nd = a.ndim
    return pl.BlockSpec((1,) + a.shape[1:], lambda b, l: (l,) + (0,) * (nd - 1))


def _cspec(a):
    nd = a.ndim
    return pl.BlockSpec(a.shape, lambda b, l: (0,) * nd)


def encoder_stack_forward(x, sp, final_g, final_b, num_heads, eps=1e-5):
    B, S, D = x.shape
    depth = sp["qkv_w"].shape[0]
    fin_g, fin_b = final_g.reshape(1, D), final_b.reshape(1, D)
    return pl.pallas_call(
        partial(_encoder_stack_kernel, num_heads=num_heads, eps=eps),
        out_shape=jax.ShapeDtypeStruct((B, S, D), jnp.float32),
        grid=(B, depth),
        in_specs=[pl.BlockSpec((1, S, D), lambda b, l: (b, 0, 0))]
                 + [_wspec(sp[k]) for k in _BLOCK_KEYS]
                 + [_cspec(fin_g), _cspec(fin_b)],
        out_specs=pl.BlockSpec((1, S, D), lambda b, l: (b, 0, 0)),
        scratch_shapes=[pltpu.VMEM((S, D), jnp.float32)],
        compiler_params=pltpu.CompilerParams(
            dimension_semantics=("parallel", "arbitrary")),
    )(x, *[sp[k] for k in _BLOCK_KEYS], fin_g, fin_b)


def decoder_stack_forward(x, sp, pos, final_g, final_b, pred_w, pred_b,
                          num_heads, eps=1e-5):
    B, S, D = x.shape
    P = pred_w.shape[1]
    depth = sp["qkv_w"].shape[0]
    fin_g, fin_b = final_g.reshape(1, D), final_b.reshape(1, D)
    pb2 = pred_b.reshape(1, P)
    out = pl.pallas_call(
        partial(_decoder_stack_kernel, num_heads=num_heads, eps=eps),
        out_shape=jax.ShapeDtypeStruct((B, S, P), jnp.float32),
        grid=(B, depth),
        in_specs=[pl.BlockSpec((1, S, D), lambda b, l: (b, 0, 0)), _cspec(pos)]
                 + [_wspec(sp[k]) for k in _BLOCK_KEYS]
                 + [_cspec(fin_g), _cspec(fin_b), _cspec(pred_w), _cspec(pb2)],
        out_specs=pl.BlockSpec((1, S, P), lambda b, l: (b, 0, 0)),
        scratch_shapes=[pltpu.VMEM((S, D), jnp.float32)],
        compiler_params=pltpu.CompilerParams(
            dimension_semantics=("parallel", "arbitrary")),
    )(x, pos, *[sp[k] for k in _BLOCK_KEYS], fin_g, fin_b, pred_w, pb2)
    return out[:, 1:, :]                                       # drop cls token


# ----------------------------- small fused kernels ----------------------------

def _patch_embed_kernel(x_ref, w_ref, b_ref, pos_ref, o_ref):
    """PatchEmbed3D (conv == matmul) fused with the pos_embed add."""
    y = _mm(x_ref[0], w_ref[...]) + b_ref[...]
    o_ref[0] = y + pos_ref[0]


def patch_embed_forward(patches, w, b, pos):
    B, L, K = patches.shape
    D = w.shape[1]
    return pl.pallas_call(
        _patch_embed_kernel,
        out_shape=jax.ShapeDtypeStruct((B, L, D), jnp.float32),
        grid=(B,),
        in_specs=[pl.BlockSpec((1, L, K), lambda i: (i, 0, 0)),
                  pl.BlockSpec((K, D), lambda i: (0, 0)),
                  pl.BlockSpec((1, D), lambda i: (0, 0)),
                  pl.BlockSpec((1, L, D), lambda i: (0, 0, 0))],
        out_specs=pl.BlockSpec((1, L, D), lambda i: (i, 0, 0)),
        compiler_params=pltpu.CompilerParams(dimension_semantics=("parallel",)),
    )(patches, w, b.reshape(1, D), pos)


def _linear_kernel(x_ref, w_ref, b_ref, o_ref):
    o_ref[...] = _mm(x_ref[...], w_ref[...]) + b_ref[...]


def linear(x, w, b):
    """y = x @ w + b with adaptive row tiling (parallel grid when M is large)."""
    K, Nout = w.shape
    lead = x.shape[:-1]
    x2 = x.reshape(-1, K)
    M = x2.shape[0]
    bm = 256 if (M > 256 and M % 256 == 0) else M
    out = pl.pallas_call(
        _linear_kernel,
        out_shape=jax.ShapeDtypeStruct((M, Nout), jnp.float32),
        grid=(M // bm,),
        in_specs=[pl.BlockSpec((bm, K), lambda i: (i, 0)),
                  pl.BlockSpec((K, Nout), lambda i: (0, 0)),
                  pl.BlockSpec((1, Nout), lambda i: (0, 0))],
        out_specs=pl.BlockSpec((bm, Nout), lambda i: (i, 0)),
        compiler_params=pltpu.CompilerParams(dimension_semantics=("parallel",)),
    )(x2, w, b.reshape(1, Nout))
    return out.reshape(lead + (Nout,))


def _predictor_kernel(x_ref, w1_ref, bng_ref, bnb_ref, w2_ref, b2_ref, o_ref, *, eps):
    """Contrastive predictor: Linear(no bias) -> BatchNorm1d(train)+ReLU -> Linear.
       One grid step per view => BN batch stats computed per view (PyTorch parity)."""
    x = x_ref[0].astype(jnp.float32)
    h = _mm(x, w1_ref[...])
    mean = jnp.mean(h, axis=0, keepdims=True)
    hc = h - mean
    var = jnp.mean(hc * hc, axis=0, keepdims=True)             # biased var (BN train)
    h = hc * jax.lax.rsqrt(var + eps) * bng_ref[...] + bnb_ref[...]
    h = jnp.maximum(h, 0.0)
    o_ref[0] = _mm(h, w2_ref[...]) + b2_ref[...]


def predictor_forward(latents, w1, bn_g, bn_b, w2, b2, eps=1e-5):
    V, M, D = latents.shape
    return pl.pallas_call(
        partial(_predictor_kernel, eps=eps),
        out_shape=jax.ShapeDtypeStruct((V, M, D), jnp.float32),
        grid=(V,),
        in_specs=[pl.BlockSpec((1, M, D), lambda v: (v, 0, 0)),
                  pl.BlockSpec((D, D), lambda v: (0, 0)),
                  pl.BlockSpec((1, D), lambda v: (0, 0)),
                  pl.BlockSpec((1, D), lambda v: (0, 0)),
                  pl.BlockSpec((D, D), lambda v: (0, 0)),
                  pl.BlockSpec((1, D), lambda v: (0, 0))],
        out_specs=pl.BlockSpec((1, M, D), lambda v: (v, 0, 0)),
        compiler_params=pltpu.CompilerParams(dimension_semantics=("parallel",)),
    )(latents, w1, bn_g.reshape(1, D), bn_b.reshape(1, D), w2, b2.reshape(1, D))


def _masked_mse_kernel(pred_ref, tgt_ref, mask_ref, o_ref, *, inv_p):
    d = pred_ref[...].astype(jnp.float32) - tgt_ref[...].astype(jnp.float32)
    per = jnp.sum(d * d, axis=-1, keepdims=True) * inv_p       # (M, 1) per-row mean
    m = mask_ref[...].astype(jnp.float32)                      # (1, M) lane-major
    num = jnp.dot(m, per, preferred_element_type=jnp.float32)  # (1, 1)
    den = jnp.sum(m, axis=-1, keepdims=True)                   # (1, 1)
    o_ref[...] = num / den


def masked_mse(pred, target, mask):
    """((pred - target)^2).mean(-1) * mask summed / mask.sum() (faithful: no 0-guard)."""
    N, L, P = pred.shape
    M = N * L
    out = pl.pallas_call(
        partial(_masked_mse_kernel, inv_p=1.0 / P),
        out_shape=jax.ShapeDtypeStruct((1, 1), jnp.float32),
        grid=(1,),
        in_specs=[pl.BlockSpec((M, P), lambda i: (0, 0)),
                  pl.BlockSpec((M, P), lambda i: (0, 0)),
                  pl.BlockSpec((1, M), lambda i: (0, 0))],
        out_specs=pl.BlockSpec((1, 1), lambda i: (0, 0)),
    )(pred.reshape(M, P), target.reshape(M, P), mask.reshape(1, M))
    return out[0, 0]


# ----------------------------- glue (plain JAX) -------------------------------

def patchify_channel_first(vol, p):
    """Conv3d(kernel=stride=p)-equivalent flattening: patch vector order (C, z, y, x)."""
    N, C, L, H, W = vol.shape
    l, h, w = L // p, H // p, W // p
    x = vol.reshape(N, C, l, p, h, p, w, p)
    x = x.transpose(0, 2, 4, 6, 1, 3, 5, 7)
    return x.reshape(N, l * h * w, C * p ** 3)


def patchify_channel_last(vol, p):
    """Matches MaskedAutoencoderViT.patchify ('nclrhpwq->nlhwrpqc')."""
    N, C, L, H, W = vol.shape
    l, h, w = L // p, H // p, W // p
    x = vol.reshape(N, C, l, p, h, p, w, p)
    x = x.transpose(0, 2, 4, 6, 3, 5, 7, 1)
    return x.reshape(N, l * h * w, p ** 3 * C)


def unpatchify(x, p, c):
    """Matches MaskedAutoencoderViT.unpatchify ('nlhwrpqc->nclrhpwq')."""
    N, L, _ = x.shape
    l = round(L ** (1 / 3))
    x = x.reshape(N, l, l, l, p, p, p, c)
    x = x.transpose(0, 7, 1, 4, 2, 5, 3, 6)
    return x.reshape(N, c, l * p, l * p, l * p)


def get_1d_sincos(embed_dim, pos):
    omega = np.arange(embed_dim // 2, dtype=np.float64)
    omega /= embed_dim / 2.0
    omega = 1.0 / (10000 ** omega)
    out = np.einsum("m,d->md", pos.reshape(-1).astype(np.float64), omega)
    return np.concatenate([np.sin(out), np.cos(out)], axis=1)


def get_3d_sincos_pos_embed(embed_dim, grid_size, cls_token=False):
    assert embed_dim % 3 == 0 and (embed_dim // 3) % 2 == 0
    g = np.arange(grid_size, dtype=np.float32)
    gl, gh, gw = np.meshgrid(g, g, g, indexing="ij")
    emb = np.concatenate([get_1d_sincos(embed_dim // 3, gl),
                          get_1d_sincos(embed_dim // 3, gh),
                          get_1d_sincos(embed_dim // 3, gw)], axis=1)
    if cls_token:
        emb = np.concatenate([np.zeros((1, embed_dim)), emb], axis=0)
    return emb.astype(np.float32)


def _sobel_kernels_3d():
    h = np.array([1.0, 2.0, 1.0], np.float32)
    d = np.array([-1.0, 0.0, 1.0], np.float32)
    gz = np.einsum("i,j,k->ijk", d, h, h)
    gy = np.einsum("i,j,k->ijk", h, d, h)
    gx = np.einsum("i,j,k->ijk", h, h, d)
    return np.stack([gz, gy, gx])


def sobel_filter_3d(vol):
    # TODO(synk): SobelFilter3d definition not provided; standard depthwise 3D Sobel gradient magnitude.
    N, C, L, H, W = vol.shape
    k = jnp.asarray(_sobel_kernels_3d())
    x = vol.reshape(N * C, 1, L, H, W)
    w = k[:, None]
    g = jax.lax.conv_general_dilated(x, w, (1, 1, 1), "SAME",
                                     dimension_numbers=("NCDHW", "OIDHW", "NCDHW"))
    mag = jnp.sqrt(jnp.sum(g * g, axis=1) + 1e-12)
    return mag.reshape(N, C, L, H, W)


def gaussian_blur_3d(vol, sigma=2.0):
    # TODO(synk): perform_3d_gaussian_blur definition not provided; separable Gaussian, radius = 2*sigma.
    radius = int(2 * sigma)
    xs = np.arange(-radius, radius + 1, dtype=np.float32)
    k1 = np.exp(-(xs ** 2) / (2 * sigma ** 2))
    k1 = jnp.asarray(k1 / k1.sum())
    N, C, L, H, W = vol.shape
    x = vol.reshape(N * C, 1, L, H, W)
    for axis in range(3):
        shape = [1, 1, 1, 1, 1]
        shape[2 + axis] = k1.shape[0]
        w = k1.reshape(shape)
        x = jax.lax.conv_general_dilated(x, w, (1, 1, 1), "SAME",
                                         dimension_numbers=("NCDHW", "OIDHW", "NCDHW"))
    return x.reshape(N, C, L, H, W)


# ----------------------------- model pieces -----------------------------------

def random_masking(x, mask_ratio, key):
    N, L, D = x.shape
    len_keep = int(L * (1 - mask_ratio))
    noise = jax.random.uniform(key, (N, L))
    ids_shuffle = jnp.argsort(noise, axis=1)
    ids_restore = jnp.argsort(ids_shuffle, axis=1)
    ids_keep = ids_shuffle[:, :len_keep]
    x_masked = jnp.take_along_axis(x, ids_keep[:, :, None], axis=1)
    mask = jnp.ones((N, L), jnp.float32).at[:, :len_keep].set(0.0)
    mask = jnp.take_along_axis(mask, ids_restore, axis=1)
    return x_masked, mask, ids_restore


def forward_encoder(params, vols, mask_ratio, key, cfg):
    p = cfg["patch_size"]
    patches = patchify_channel_first(vols, p)                    # (B, L, C*p^3)
    x = patch_embed_forward(patches, params["patch_w"], params["patch_b"],
                            params["pos_embed"][:, 1:, :])       # fused embed + pos add
    x, mask, ids_restore = random_masking(x, mask_ratio, key)
    cls = params["cls_token"] + params["pos_embed"][:, :1, :]
    cls = jnp.broadcast_to(cls, (x.shape[0], 1, cls.shape[-1]))
    x = jnp.concatenate([cls, x], axis=1)
    latent = encoder_stack_forward(x, params["enc_stack"], params["norm_g"],
                                   params["norm_b"], cfg["num_heads"])
    return latent, mask, ids_restore


def forward_decoder(params, x, ids_restore, cfg):
    x = linear(x, params["dec_embed_w"], params["dec_embed_b"])
    N, _, Dd = x.shape
    L = ids_restore.shape[1]
    n_mask = L + 1 - x.shape[1]
    mask_tokens = jnp.broadcast_to(params["mask_token"], (N, n_mask, Dd))
    x_ = jnp.concatenate([x[:, 1:, :], mask_tokens], axis=1)
    x_ = jnp.take_along_axis(x_, ids_restore[:, :, None], axis=1)
    x = jnp.concatenate([x[:, :1, :], x_], axis=1)
    # pos add + blocks + decoder_norm + decoder_pred all fused in one pallas_call
    pred = decoder_stack_forward(x, params["dec_stack"], params["dec_pos_embed"],
                                 params["dec_norm_g"], params["dec_norm_b"],
                                 params["dec_pred_w"], params["dec_pred_b"],
                                 cfg["decoder_num_heads"])
    return pred


def forward_loss(params, vol, pred, mask, cfg, edge_map_weight=0.0):
    p = cfg["patch_size"]
    target = patchify_channel_last(vol, p)
    # norm_pix_loss = False (default)
    pred_vol = unpatchify(pred, p, cfg["in_chans"])
    target_vol = unpatchify(target, p, cfg["in_chans"])
    pred_edge = sobel_filter_3d(pred_vol)
    target_edge = sobel_filter_3d(gaussian_blur_3d(target_vol, 2.0))
    raw_edge_map_loss = jnp.mean((pred_edge - target_edge) ** 2)
    edge_map_loss = edge_map_weight * raw_edge_map_loss
    reconstruction_loss = masked_mse(pred, target, mask)
    # TODO(synk): vgg_perceptual_loss needs pretrained VGG weights (not loadable in-script); returned as 0.
    percep_loss = cfg["perceptual_weight"] * jnp.float32(0.0)
    loss = edge_map_loss + reconstruction_loss + percep_loss
    return [loss, raw_edge_map_loss, reconstruction_loss, percep_loss]


def contrastive_mae_forward(params, view1, view2, key, cfg,
                            mask_ratio=0.75, edge_map_weight=0.0):
    N = view1.shape[0]
    # both views share one patch-embed + encoder pallas_call (batched along axis 0)
    vols = jnp.concatenate([view1, view2], axis=0)
    latents, masks, idss = forward_encoder(params, vols, mask_ratio, key, cfg)
    latent1, latent2 = latents[:N], latents[N:]
    mask, ids_restore = masks[:N], idss[:N]

    pred = forward_decoder(params, latent1, ids_restore, cfg)
    loss = forward_loss(params, view1, pred, mask, cfg, edge_map_weight)

    D = latent1.shape[2]
    l1 = latent1.reshape(-1, D)
    l2 = latent2.reshape(-1, D)

    # one predictor pallas_call, grid over the two views (per-view BN stats)
    p12 = predictor_forward(jnp.stack([l1, l2], axis=0),
                            params["pred_fc1_w"], params["pred_bn_g"],
                            params["pred_bn_b"], params["pred_fc2_w"],
                            params["pred_fc2_b"])
    p1, p2 = p12[0], p12[1]
    return loss, pred, mask, p1, p2, jax.lax.stop_gradient(l1), jax.lax.stop_gradient(l2)


# ----------------------------- params ------------------------------------------

def xavier_uniform(key, shape):
    fan_in, fan_out = shape[0], shape[1]
    limit = math.sqrt(6.0 / (fan_in + fan_out))
    return jax.random.uniform(key, shape, jnp.float32, -limit, limit)


def init_params(key, cfg):
    D, Dd = cfg["embed_dim"], cfg["decoder_embed_dim"]
    p, C = cfg["patch_size"], cfg["in_chans"]
    gsize = cfg["volume_size"] // p
    hidden, dhidden = int(D * cfg["mlp_ratio"]), int(Dd * cfg["mlp_ratio"])
    keys = iter(jax.random.split(key, 512))
    xavier = lambda shape: xavier_uniform(next(keys), shape)

    def stacked_blocks(depth, dim, hid):
        # per-layer weights stacked on a leading "layer" axis; matmul weights stored
        # bf16 (halves DMA, MXU-native); layout fixed at init (no per-forward reshapes).
        stk = lambda shape: jnp.stack([xavier(shape) for _ in range(depth)])
        return dict(
            n1g=jnp.ones((depth, 1, dim)), n1b=jnp.zeros((depth, 1, dim)),
            qkv_w=stk((dim, 3 * dim)).astype(jnp.bfloat16),
            qkv_b=jnp.zeros((depth, 1, 3 * dim)),
            proj_w=stk((dim, dim)).astype(jnp.bfloat16),
            proj_b=jnp.zeros((depth, 1, dim)),
            n2g=jnp.ones((depth, 1, dim)), n2b=jnp.zeros((depth, 1, dim)),
            fc1_w=stk((dim, hid)).astype(jnp.bfloat16),
            fc1_b=jnp.zeros((depth, 1, hid)),
            fc2_w=stk((hid, dim)).astype(jnp.bfloat16),
            fc2_b=jnp.zeros((depth, 1, dim)))

    params = dict(
        patch_w=xavier((C * p ** 3, D)), patch_b=jnp.zeros((D,)),
        cls_token=0.02 * jax.random.normal(next(keys), (1, 1, D)),
        mask_token=0.02 * jax.random.normal(next(keys), (1, 1, Dd)),
        pos_embed=jnp.asarray(get_3d_sincos_pos_embed(D, gsize, True))[None],
        dec_pos_embed=jnp.asarray(get_3d_sincos_pos_embed(Dd, gsize, True))[None],
        enc_stack=stacked_blocks(cfg["depth"], D, hidden),
        norm_g=jnp.ones((D,)), norm_b=jnp.zeros((D,)),
        dec_embed_w=xavier((D, Dd)), dec_embed_b=jnp.zeros((Dd,)),
        dec_stack=stacked_blocks(cfg["decoder_depth"], Dd, dhidden),
        dec_norm_g=jnp.ones((Dd,)), dec_norm_b=jnp.zeros((Dd,)),
        dec_pred_w=xavier((Dd, p ** 3 * C)), dec_pred_b=jnp.zeros((p ** 3 * C,)),
        pred_fc1_w=xavier((D, D)),
        pred_bn_g=jnp.ones((D,)), pred_bn_b=jnp.zeros((D,)),
        pred_fc2_w=xavier((D, D)), pred_fc2_b=jnp.zeros((D,)),
    )
    return params


# ----------------------------- main ---------------------------------------------

if __name__ == "__main__":
    cfg = dict(volume_size=16, patch_size=8, in_chans=3,
               embed_dim=48, depth=2, num_heads=4,
               decoder_embed_dim=24, decoder_depth=1, decoder_num_heads=4,
               mlp_ratio=4.0, perceptual_weight=1.0)

    key = jax.random.PRNGKey(0)
    kp, k1, k2, km = jax.random.split(key, 4)
    params = init_params(kp, cfg)

    view1 = jax.random.normal(k1, (2, cfg["in_chans"], 16, 16, 16), jnp.float32)
    view2 = jax.random.normal(k2, (2, cfg["in_chans"], 16, 16, 16), jnp.float32)

    loss, pred, mask, p1, p2, l1, l2 = contrastive_mae_forward(
        params, view1, view2, km, cfg, mask_ratio=0.75, edge_map_weight=0.0)

    jax.block_until_ready((loss, pred, mask, p1, p2, l1, l2))
    assert pred.shape == (2, 8, cfg["patch_size"] ** 3 * cfg["in_chans"])
    assert mask.shape == (2, 8)
    assert p1.shape == (2 * 3, cfg["embed_dim"]) and p2.shape == p1.shape
    assert all(jnp.isfinite(jnp.asarray(v)).all() for v in loss)
    print("KERNEL_OK")
</pallas_src>

<mosaic_0001>
module attributes {stable_mosaic.version = 11 : i64} {
  func.func @_patch_embed_kernel(%arg0: i32, %arg1: memref<1x8x1536xf32, #tpu.memory_space<vmem>>, %arg2: memref<1536x48xf32, #tpu.memory_space<vmem>>, %arg3: memref<1x48xf32, #tpu.memory_space<vmem>>, %arg4: memref<1x8x48xf32, #tpu.memory_space<vmem>>, %arg5: memref<1x8x48xf32, #tpu.memory_space<vmem>>) attributes {dimension_semantics = [#tpu.dimension_semantics<parallel>], iteration_bounds = array<i64: 4>, scalar_prefetch = 0 : i64, scratch_operands = 0 : i64, tpu.core_type = #tpu.core_type<tc>, window_params = [{transform_indices = @transform_0, window_bounds = array<i64: 1, 8, 1536>}, {pipeline_mode = #tpu.pipeline_mode<synchronous>, transform_indices = @transform_1, window_bounds = array<i64: 1536, 48>}, {pipeline_mode = #tpu.pipeline_mode<synchronous>, transform_indices = @transform_2, window_bounds = array<i64: 1, 48>}, {pipeline_mode = #tpu.pipeline_mode<synchronous>, transform_indices = @transform_3, window_bounds = array<i64: 1, 8, 48>}, {transform_indices = @transform_4, window_bounds = array<i64: 1, 8, 48>}]} {
    %c0 = arith.constant 0 : index
    %c0_0 = arith.constant 0 : index
    %c0_1 = arith.constant 0 : index
    %0 = vector.load %arg1[%c0, %c0_0, %c0_1] : memref<1x8x1536xf32, #tpu.memory_space<vmem>>, vector<1x8x1536xf32>
    %1 = vector.shape_cast %0 : vector<1x8x1536xf32> to vector<8x1536xf32>
    %c0_2 = arith.constant 0 : index
    %c0_3 = arith.constant 0 : index
    %2 = vector.load %arg2[%c0_2, %c0_3] : memref<1536x48xf32, #tpu.memory_space<vmem>>, vector<1536x48xf32>
    %3 = arith.truncf %1 : vector<8x1536xf32> to vector<8x1536xbf16>
    %4 = arith.truncf %2 : vector<1536x48xf32> to vector<1536x48xbf16>
    %cst = arith.constant dense<0.000000e+00> : vector<8x48xf32>
    %5 = tpu.matmul %3, %4, %cst {dimension_numbers = #tpu.dot_dimension_numbers<[1], [0], [0], [1], [0, 0, 1, 1], [], []>} : vector<8x1536xbf16>, vector<1536x48xbf16>, vector<8x48xf32> -> vector<8x48xf32>
    %c0_4 = arith.constant 0 : index
    %c0_5 = arith.constant 0 : index
    %6 = vector.load %arg3[%c0_4, %c0_5] : memref<1x48xf32, #tpu.memory_space<vmem>>, vector<1x48xf32>
    %7 = vector.broadcast %6 : vector<1x48xf32> to vector<8x48xf32>
    %8 = arith.addf %5, %7 : vector<8x48xf32>
    %c0_6 = arith.constant 0 : index
    %c0_7 = arith.constant 0 : index
    %c0_8 = arith.constant 0 : index
    %9 = vector.load %arg4[%c0_6, %c0_7, %c0_8] : memref<1x8x48xf32, #tpu.memory_space<vmem>>, vector<1x8x48xf32>
    %10 = vector.shape_cast %9 : vector<1x8x48xf32> to vector<8x48xf32>
    %11 = arith.addf %8, %10 : vector<8x48xf32>
    %c0_9 = arith.constant 0 : index
    %c0_10 = arith.constant 0 : index
    %c0_11 = arith.constant 0 : index
    %12 = vector.load %arg5[%c0_9, %c0_10, %c0_11] : memref<1x8x48xf32, #tpu.memory_space<vmem>>, vector<1x8x48xf32>
    %13 = vector.shape_cast %12 : vector<1x8x48xf32> to vector<8x48xf32>
    %14 = vector.shape_cast %11 : vector<8x48xf32> to vector<1x8x48xf32>
    tpu.vector_store %arg5[%c0_9, %c0_10, %c0_11], %14 {strides = array<i32>} : memref<1x8x48xf32, #tpu.memory_space<vmem>>, vector<1x8x48xf32>,
    return
  }
  func.func @transform_0(%arg0: i32) -> (i32, i32, i32) {
    %c0_i32 = arith.constant 0 : i32
    %c0_i32_0 = arith.constant 0 : i32
    %c0_i32_1 = arith.constant 0 : i32
    return %arg0, %c0_i32, %c0_i32_0 : i32, i32, i32
  }
  func.func @transform_1(%arg0: i32) -> (i32, i32) {
    %c0_i32 = arith.constant 0 : i32
    %c0_i32_0 = arith.constant 0 : i32
    %c0_i32_1 = arith.constant 0 : i32
    return %c0_i32, %c0_i32_0 : i32, i32
  }
  func.func @transform_2(%arg0: i32) -> (i32, i32) {
    %c0_i32 = arith.constant 0 : i32
    %c0_i32_0 = arith.constant 0 : i32
    %c0_i32_1 = arith.constant 0 : i32
    return %c0_i32, %c0_i32_0 : i32, i32
  }
  func.func @transform_3(%arg0: i32) -> (i32, i32, i32) {
    %c0_i32 = arith.constant 0 : i32
    %c0_i32_0 = arith.constant 0 : i32
    %c0_i32_1 = arith.constant 0 : i32
    %c0_i32_2 = arith.constant 0 : i32
    return %c0_i32, %c0_i32_0, %c0_i32_1 : i32, i32, i32
  }
  func.func @transform_4(%arg0: i32) -> (i32, i32, i32) {
    %c0_i32 = arith.constant 0 : i32
    %c0_i32_0 = arith.constant 0 : i32
    %c0_i32_1 = arith.constant 0 : i32
    return %arg0, %c0_i32, %c0_i32_0 : i32, i32, i32
  }
}

</mosaic_0001>

<llo_original>
// kernel: tpu_custom_call.1
$region0: #{tpu_custom_call.1}
  #allocation0 [shape = 'u32[]', space=smem, size = 0x4, offset = 0x4, fixed_abs, tag = 'smem constant byte address 0x4 - core index']
  #allocation1 [shape = 'u32[144,128]{1,0:T(1,128)}', space=vmem, size = 0x12000, scoped, tag = 'internal scratch']
  %s0 = inlined_call_operand.vmem [shape: f32[4,8,1536], index: 0, kind: input, shape index: {}]
  %s1 = inlined_call_operand.vmem [shape: f32[1536,48], index: 1, kind: input, shape index: {}]
  %s2 = inlined_call_operand.vmem [shape: f32[1,48], index: 2, kind: input, shape index: {}]
  %s3 = inlined_call_operand.vmem [shape: f32[1,8,48], index: 3, kind: input, shape index: {}]
  %s4 = inlined_call_operand.hbm [shape: f32[4,8,48], index: 4, kind: output, shape index: {}]
  %s5 = sld [smem:[#allocation0]]
  $region49: #{tpu_custom_call.1} parent=0
    _
  %s7 = ssub.s32 1, %s5
  %s8 = scalar_select 0, %s7, %s5
  $region1: #{tpu_custom_call.1} parent=0
    #allocation2 [shape = 'u8[8192]{0}', space=vmem, size = 0x2000, scoped, tag = 'output window, operand 0']
    #allocation3 [shape = 's32[2]{0}', space=sflag, size = 0x8, scoped, tag = 'scoped memory for tpu_custom_call.1']
    %9 = vsyncpa [#allocation3], 0
    %s10 = scalar_lea.sflag [#allocation3], 1
    %11 = vsyncpa %s10, 0
    loop: start=0, step=1, limit=6
    $region2: #{tpu_custom_call.1} parent=1 // loop_pre_header
      _
    $region3: #{tpu_custom_call.1} parent=1 // loop_header
      %s13 = sphi 0, %s17
      %p14 = scmp.ge.s32.totalorder %s13, 6
      %s23 = sphi 0, %s25
      %s26 = sphi 0, %s23
      %s27 = sphi 0, %s26
      %s43 = sphi 0, %s27
      %s47 = sphi 0, %s47
      %s49 = sphi 0, %s47
      %s50 = sphi 0, %s49
      %s64 = sphi 0, %s50
      %s68 = sphi 0, %s68
      %s70 = sphi 0, %s68
      %s71 = sphi 0, %s70
      %s85 = sphi 0, %s71
      %s89 = sphi 0, %s89
      %s91 = sphi 0, %s89
      %s92 = sphi 0, %s91
      %s106 = sphi 0, %s92
      %s112 = sphi 0, %s114
      %s115 = sphi 0, %s112
      %s116 = sphi 0, %s115
      %s132 = sphi 0, %s116
    $region4: #{tpu_custom_call.1} parent=1 // loop_header_branch
      %16 = sbr.rel (%p14) target = $region8
    $region5: #{tpu_custom_call.1} parent=1 // loop_body
      %s18 = ssub.s32 %s13, 1
      %s19 = ssub.s32 %s13, 2
      %s20 = sadd.s32 %s13, 1
      %s21 = ssub.s32 %s13, %s20
      %p22 = scmp.eq.s32.totalorder %s21, 0
      %s24 = sadd.s32 %s23, 1
      %s25 = scalar_select %p22, %s23, %s24
      %p28 = pneg %p22
      %p29 = scmp.eq.s32.totalorder %s13, 3
      %p30 = por %p28, %p29
      %p31 = scmp.ne.s32.totalorder %s23, %s26
      %p32 = scmp.eq.s32.totalorder %s13, 0
      %p33 = por %p31, %p32
      %p34 = scmp.ne.s32.totalorder %s23, %s26
      %p35 = scmp.eq.s32.totalorder %s18, 3
      %p36 = por %p34, %p35
      %p37 = scmp.ne.s32.totalorder %s26, %s27
      %p38 = scmp.eq.s32.totalorder %s18, 0
      %p39 = por %p37, %p38
      %p40 = scmp.ne.s32.totalorder %s26, %s27
      %p41 = scmp.eq.s32.totalorder %s19, 3
      %p42 = por %p40, %p41
      %p44 = scmp.ne.s32.totalorder %s27, %s43
      %p45 = scmp.eq.s32.totalorder %s19, 0
      %p46 = por %p44, %p45
      %s48 = sadd.s32 %s47, 1
      %p51 = scmp.eq.s32.totalorder %s13, 3
      %p52 = scmp.ne.s32.totalorder %s47, %s49
      %p53 = scmp.eq.s32.totalorder %s13, 0
      %p54 = por %p52, %p53
      %p55 = scmp.ne.s32.totalorder %s47, %s49
      %p56 = scmp.eq.s32.totalorder %s18, 3
      %p57 = por %p55, %p56
      %p58 = scmp.ne.s32.totalorder %s49, %s50
      %p59 = scmp.eq.s32.totalorder %s18, 0
      %p60 = por %p58, %p59
      %p61 = scmp.ne.s32.totalorder %s49, %s50
      %p62 = scmp.eq.s32.totalorder %s19, 3
      %p63 = por %p61, %p62
      %p65 = scmp.ne.s32.totalorder %s50, %s64
      %p66 = scmp.eq.s32.totalorder %s19, 0
      %p67 = por %p65, %p66
      %s69 = sadd.s32 %s68, 1
      %p72 = scmp.eq.s32.totalorder %s13, 3
      %p73 = scmp.ne.s32.totalorder %s68, %s70
      %p74 = scmp.eq.s32.totalorder %s13, 0
      %p75 = por %p73, %p74
      %p76 = scmp.ne.s32.totalorder %s68, %s70
      %p77 = scmp.eq.s32.totalorder %s18, 3
      %p78 = por %p76, %p77
      %p79 = scmp.ne.s32.totalorder %s70, %s71
      %p80 = scmp.eq.s32.totalorder %s18, 0
      %p81 = por %p79, %p80
      %p82 = scmp.ne.s32.totalorder %s70, %s71
      %p83 = scmp.eq.s32.totalorder %s19, 3
      %p84 = por %p82, %p83
      %p86 = scmp.ne.s32.totalorder %s71, %s85
      %p87 = scmp.eq.s32.totalorder %s19, 0
      %p88 = por %p86, %p87
      %s90 = sadd.s32 %s89, 1
      %p93 = scmp.eq.s32.totalorder %s13, 3
      %p94 = scmp.ne.s32.totalorder %s89, %s91
      %p95 = scmp.eq.s32.totalorder %s13, 0
      %p96 = por %p94, %p95
      %p97 = scmp.ne.s32.totalorder %s89, %s91
      %p98 = scmp.eq.s32.totalorder %s18, 3
      %p99 = por %p97, %p98
      %p100 = scmp.ne.s32.totalorder %s91, %s92
      %p101 = scmp.eq.s32.totalorder %s18, 0
      %p102 = por %p100, %p101
      %p103 = scmp.ne.s32.totalorder %s91, %s92
      %p104 = scmp.eq.s32.totalorder %s19, 3
      %p105 = por %p103, %p104
      %p107 = scmp.ne.s32.totalorder %s92, %s106
      %p108 = scmp.eq.s32.totalorder %s19, 0
      %p109 = por %p107, %p108
      %s110 = ssub.s32 %s13, %s20
      %p111 = scmp.eq.s32.totalorder %s110, 0
      %s113 = sadd.s32 %s112, 1
      %s114 = scalar_select %p111, %s112, %s113
      %p117 = pneg %p111
      %p118 = scmp.eq.s32.totalorder %s13, 3
      %p119 = por %p117, %p118
      %p120 = scmp.ne.s32.totalorder %s112, %s115
      %p121 = scmp.eq.s32.totalorder %s13, 0
      %p122 = por %p120, %p121
      %p123 = scmp.ne.s32.totalorder %s112, %s115
      %p124 = scmp.eq.s32.totalorder %s18, 3
      %p125 = por %p123, %p124
      %p126 = scmp.ne.s32.totalorder %s115, %s116
      %p127 = scmp.eq.s32.totalorder %s18, 0
      %p128 = por %p126, %p127
      %p129 = scmp.ne.s32.totalorder %s115, %s116
      %p130 = scmp.eq.s32.totalorder %s19, 3
      %p131 = por %p129, %p130
      %p133 = scmp.ne.s32.totalorder %s116, %s132
      %p134 = scmp.eq.s32.totalorder %s19, 0
      %p135 = por %p133, %p134
      %p136 = scmp.le.s32.totalorder 1, %s13
      %p137 = scmp.lt.s32.totalorder %s13, 5
      %p138 = pnand %p136, %p137
      %p139 = pneg %p138
      // Predicated region
      $region9: #{tpu_custom_call.1} parent=5 // pred_check
        _
      $region10: #{tpu_custom_call.1} parent=5 // pred_check_branch
        %141 = sbr.rel (%p138) target = $region12
      $region11: #{tpu_custom_call.1} parent=5 // pred_region
        %s142 = ssub.s32 %s13, 1
        // Predicated region
        $region13: #{tpu_custom_call.1} parent=11 // pred_check
          %p143 = pneg %p60
        $region14: #{tpu_custom_call.1} parent=11 // pred_check_branch
          %145 = sbr.rel (%p143) target = $region16
        $region15: #{tpu_custom_call.1} parent=11 // pred_region
          _
        $region16: #{tpu_custom_call.1} parent=11 // pred_fallthru
          _
        // Predicated region
        $region17: #{tpu_custom_call.1} parent=11 // pred_check
          %p146 = pneg %p81
        $region18: #{tpu_custom_call.1} parent=11 // pred_check_branch
          %148 = sbr.rel (%p146) target = $region20
        $region19: #{tpu_custom_call.1} parent=11 // pred_region
          _
        $region20: #{tpu_custom_call.1} parent=11 // pred_fallthru
          _
        // Predicated region
        $region21: #{tpu_custom_call.1} parent=11 // pred_check
          %p149 = pneg %p102
        $region22: #{tpu_custom_call.1} parent=11 // pred_check_branch
          %151 = sbr.rel (%p149) target = $region24
        $region23: #{tpu_custom_call.1} parent=11 // pred_region
          _
        $region24: #{tpu_custom_call.1} parent=11 // pred_fallthru
          _
      $region12: #{tpu_custom_call.1} parent=5 // pred_fallthru
        _
      %p152 = scmp.lt.s32.totalorder %s13, 4
      // Predicated region
      $region25: #{tpu_custom_call.1} parent=5 // pred_check
        %p153 = pneg %p152
      $region26: #{tpu_custom_call.1} parent=5 // pred_check_branch
        %155 = sbr.rel (%p153) target = $region28
      $region27: #{tpu_custom_call.1} parent=5 // pred_region
        // Predicated region
        $region29: #{tpu_custom_call.1} parent=27 // pred_check
          %p156 = pneg %p33
        $region30: #{tpu_custom_call.1} parent=27 // pred_check_branch
          %158 = sbr.rel (%p156) target = $region32
        $region31: #{tpu_custom_call.1} parent=27 // pred_region
          %p159 = scmp.lt.s32.totalorder %s13, 3
          %s160 = scalar_select %p159, %s13, 3
          %s161 = smul.addr %s160, 12
          %s162 = smul.addr %s161, 8
          %s163 = scalar_lea.vmem %s0, %s162
        $region32: #{tpu_custom_call.1} parent=27 // pred_fallthru
          _
      $region28: #{tpu_custom_call.1} parent=5 // pred_fallthru
        _
      %p164 = scmp.le.s32.totalorder 1, %s13
      %p165 = scmp.lt.s32.totalorder %s13, 5
      %p166 = pnand %p164, %p165
      %p167 = pneg %p166
      // Predicated region
      $region33: #{tpu_custom_call.1} parent=5 // pred_check
        _
      $region34: #{tpu_custom_call.1} parent=5 // pred_check_branch
        %169 = sbr.rel (%p166) target = $region36
      $region35: #{tpu_custom_call.1} parent=5 // pred_region
        %s170 = ssub.s32 %s13, 1
        %p171 = scmp.lt.s32.totalorder %s18, 3
        %s172 = scalar_select %p171, %s18, 3
        %s173 = smul.addr %s172, 12
        %s174 = smul.addr %s173, 8
        %s175 = scalar_lea.vmem %s0, %s174
        %p176 = pneg %p39
        %p177 = pneg %p36
        %p178 = pneg %p60
        %p179 = pneg %p57
        %p180 = pneg %p81
        %p181 = pneg %p78
        %p182 = pneg %p102
        %p183 = pneg %p99
        %p184 = pneg %p128
        %p185 = pneg %p125
        %s186 = sand.u32 %s115, 1
        %s187 = scalar_lea.sflag [#allocation3], %s186
        %s188 = sand.u32 %s115, 1
        %s189 = smul.addr %s188, 8
        %s190 = scalar_lea.vmem [#allocation2], %s189
        %p191 = scmp.lt.s32.totalorder %s18, 3
        %s192 = scalar_select %p191, %s18, 3
        %s193 = smul.addr %s192, 12
        %s194 = smul.addr %s193, 8
        %s195 = scalar_lea.vmem %s0, %s194
        %v197 = vld [vmem:[%s195] sm:$0xff]
        %v198 = vld [vmem:[%s195 + $0x8] sm:$0xff]
        %v199 = vld [vmem:[%s195 + $0x10] sm:$0xff]
        %v200 = vld [vmem:[%s195 + $0x18] sm:$0xff]
        %v201 = vld [vmem:[%s195 + $0x20] sm:$0xff]
        %v202 = vld [vmem:[%s195 + $0x28] sm:$0xff]
        %v203 = vld [vmem:[%s195 + $0x30] sm:$0xff]
        %v204 = vld [vmem:[%s195 + $0x38] sm:$0xff]
        %v205 = vld [vmem:[%s195 + $0x40] sm:$0xff]
        %v206 = vld [vmem:[%s195 + $0x48] sm:$0xff]
        %v207 = vld [vmem:[%s195 + $0x50] sm:$0xff]
        %v208 = vld [vmem:[%s195 + $0x58] sm:$0xff]
        %v209 = vld [vmem:[%s1] sm:$0xff]
        %v210 = vld [vmem:[%s1 + $0x8] sm:$0xff]
        %v211 = vld [vmem:[%s1 + $0x10] sm:$0xff]
        %v212 = vld [vmem:[%s1 + $0x18] sm:$0xff]
        %v213 = vld [vmem:[%s1 + $0x20] sm:$0xff]
        %v214 = vld [vmem:[%s1 + $0x28] sm:$0xff]
        %v215 = vld [vmem:[%s1 + $0x30] sm:$0xff]
        %v216 = vld [vmem:[%s1 + $0x38] sm:$0xff]
        %v217 = vld [vmem:[%s1 + $0x40] sm:$0xff]
        %v218 = vld [vmem:[%s1 + $0x48] sm:$0xff]
        %v219 = vld [vmem:[%s1 + $0x50] sm:$0xff]
        %v220 = vld [vmem:[%s1 + $0x58] sm:$0xff]
        %v221 = vld [vmem:[%s1 + $0x60] sm:$0xff]
        %v222 = vld [vmem:[%s1 + $0x68] sm:$0xff]
        %v223 = vld [vmem:[%s1 + $0x70] sm:$0xff]
        %v224 = vld [vmem:[%s1 + $0x78] sm:$0xff]
        %v225 = vld [vmem:[%s1 + $0x80] sm:$0xff]
        %v226 = vld [vmem:[%s1 + $0x88] sm:$0xff]
        %v227 = vld [vmem:[%s1 + $0x90] sm:$0xff]
        %v228 = vld [vmem:[%s1 + $0x98] sm:$0xff]
        %v229 = vld [vmem:[%s1 + $0xa0] sm:$0xff]
        %v230 = vld [vmem:[%s1 + $0xa8] sm:$0xff]
        %v231 = vld [vmem:[%s1 + $0xb0] sm:$0xff]
        %v232 = vld [vmem:[%s1 + $0xb8] sm:$0xff]
        %v233 = vld [vmem:[%s1 + $0xc0] sm:$0xff]
        %v234 = vld [vmem:[%s1 + $0xc8] sm:$0xff]
        %v235 = vld [vmem:[%s1 + $0xd0] sm:$0xff]
        %v236 = vld [vmem:[%s1 + $0xd8] sm:$0xff]
        %v237 = vld [vmem:[%s1 + $0xe0] sm:$0xff]
        %v238 = vld [vmem:[%s1 + $0xe8] sm:$0xff]
        %v239 = vld [vmem:[%s1 + $0xf0] sm:$0xff]
        %v240 = vld [vmem:[%s1 + $0xf8] sm:$0xff]
        %v241 = vld [vmem:[%s1 + $0x100] sm:$0xff]
        %v242 = vld [vmem:[%s1 + $0x108] sm:$0xff]
        %v243 = vld [vmem:[%s1 + $0x110] sm:$0xff]
        %v244 = vld [vmem:[%s1 + $0x118] sm:$0xff]
        %v245 = vld [vmem:[%s1 + $0x120] sm:$0xff]
        %v246 = vld [vmem:[%s1 + $0x128] sm:$0xff]
        %v247 = vld [vmem:[%s1 + $0x130] sm:$0xff]
        %v248 = vld [vmem:[%s1 + $0x138] sm:$0xff]
        %v249 = vld [vmem:[%s1 + $0x140] sm:$0xff]
        %v250 = vld [vmem:[%s1 + $0x148] sm:$0xff]
        %v251 = vld [vmem:[%s1 + $0x150] sm:$0xff]
        %v252 = vld [vmem:[%s1 + $0x158] sm:$0xff]
        %v253 = vld [vmem:[%s1 + $0x160] sm:$0xff]
        %v254 = vld [vmem:[%s1 + $0x168] sm:$0xff]
        %v255 = vld [vmem:[%s1 + $0x170] sm:$0xff]
        %v256 = vld [vmem:[%s1 + $0x178] sm:$0xff]
        %v257 = vld [vmem:[%s1 + $0x180] sm:$0xff]
        %v258 = vld [vmem:[%s1 + $0x188] sm:$0xff]
        %v259 = vld [vmem:[%s1 + $0x190] sm:$0xff]
        %v260 = vld [vmem:[%s1 + $0x198] sm:$0xff]
        %v261 = vld [vmem:[%s1 + $0x1a0] sm:$0xff]
        %v262 = vld [vmem:[%s1 + $0x1a8] sm:$0xff]
        %v263 = vld [vmem:[%s1 + $0x1b0] sm:$0xff]
        %v264 = vld [vmem:[%s1 + $0x1b8] sm:$0xff]
        %v265 = vld [vmem:[%s1 + $0x1c0] sm:$0xff]
        %v266 = vld [vmem:[%s1 + $0x1c8] sm:$0xff]
        %v267 = vld [vmem:[%s1 + $0x1d0] sm:$0xff]
        %v268 = vld [vmem:[%s1 + $0x1d8] sm:$0xff]
        %v269 = vld [vmem:[%s1 + $0x1e0] sm:$0xff]
        %v270 = vld [vmem:[%s1 + $0x1e8] sm:$0xff]
        %v271 = vld [vmem:[%s1 + $0x1f0] sm:$0xff]
        %v272 = vld [vmem:[%s1 + $0x1f8] sm:$0xff]
        %v273 = vld [vmem:[%s1 + $0x200] sm:$0xff]
        %v274 = vld [vmem:[%s1 + $0x208] sm:$0xff]
        %v275 = vld [vmem:[%s1 + $0x210] sm:$0xff]
        %v276 = vld [vmem:[%s1 + $0x218] sm:$0xff]
        %v277 = vld [vmem:[%s1 + $0x220] sm:$0xff]
        %v278 = vld [vmem:[%s1 + $0x228] sm:$0xff]
        %v279 = vld [vmem:[%s1 + $0x230] sm:$0xff]
        %v280 = vld [vmem:[%s1 + $0x238] sm:$0xff]
        %v281 = vld [vmem:[%s1 + $0x240] sm:$0xff]
        %v282 = vld [vmem:[%s1 + $0x248] sm:$0xff]
        %v283 = vld [vmem:[%s1 + $0x250] sm:$0xff]
        %v284 = vld [vmem:[%s1 + $0x258] sm:$0xff]
        %v285 = vld [vmem:[%s1 + $0x260] sm:$0xff]
        %v286 = vld [vmem:[%s1 + $0x268] sm:$0xff]
        %v287 = vld [vmem:[%s1 + $0x270] sm:$0xff]
        %v288 = vld [vmem:[%s1 + $0x278] sm:$0xff]
        %v289 = vld [vmem:[%s1 + $0x280] sm:$0xff]
        %v290 = vld [vmem:[%s1 + $0x288] sm:$0xff]
        %v291 = vld [vmem:[%s1 + $0x290] sm:$0xff]
        %v292 = vld [vmem:[%s1 + $0x298] sm:$0xff]
        %v293 = vld [vmem:[%s1 + $0x2a0] sm:$0xff]
        %v294 = vld [vmem:[%s1 + $0x2a8] sm:$0xff]
        %v295 = vld [vmem:[%s1 + $0x2b0] sm:$0xff]
        %v296 = vld [vmem:[%s1 + $0x2b8] sm:$0xff]
        %v297 = vld [vmem:[%s1 + $0x2c0] sm:$0xff]
        %v298 = vld [vmem:[%s1 + $0x2c8] sm:$0xff]
        %v299 = vld [vmem:[%s1 + $0x2d0] sm:$0xff]
        %v300 = vld [vmem:[%s1 + $0x2d8] sm:$0xff]
        %v301 = vld [vmem:[%s1 + $0x2e0] sm:$0xff]
        %v302 = vld [vmem:[%s1 + $0x2e8] sm:$0xff]
        %v303 = vld [vmem:[%s1 + $0x2f0] sm:$0xff]
        %v304 = vld [vmem:[%s1 + $0x2f8] sm:$0xff]
        %v305 = vld [vmem:[%s1 + $0x300] sm:$0xff]
        %v306 = vld [vmem:[%s1 + $0x308] sm:$0xff]
        %v307 = vld [vmem:[%s1 + $0x310] sm:$0xff]
        %v308 = vld [vmem:[%s1 + $0x318] sm:$0xff]
        %v309 = vld [vmem:[%s1 + $0x320] sm:$0xff]
        %v310 = vld [vmem:[%s1 + $0x328] sm:$0xff]
        %v311 = vld [vmem:[%s1 + $0x330] sm:$0xff]
        %v312 = vld [vmem:[%s1 + $0x338] sm:$0xff]
        %v313 = vld [vmem:[%s1 + $0x340] sm:$0xff]
        %v314 = vld [vmem:[%s1 + $0x348] sm:$0xff]
        %v315 = vld [vmem:[%s1 + $0x350] sm:$0xff]
        %v316 = vld [vmem:[%s1 + $0x358] sm:$0xff]
        %v317 = vld [vmem:[%s1 + $0x360] sm:$0xff]
        %v318 = vld [vmem:[%s1 + $0x368] sm:$0xff]
        %v319 = vld [vmem:[%s1 + $0x370] sm:$0xff]
        %v320 = vld [vmem:[%s1 + $0x378] sm:$0xff]
        %v321 = vld [vmem:[%s1 + $0x380] sm:$0xff]
        %v322 = vld [vmem:[%s1 + $0x388] sm:$0xff]
        %v323 = vld [vmem:[%s1 + $0x390] sm:$0xff]
        %v324 = vld [vmem:[%s1 + $0x398] sm:$0xff]
        %v325 = vld [vmem:[%s1 + $0x3a0] sm:$0xff]
        %v326 = vld [vmem:[%s1 + $0x3a8] sm:$0xff]
        %v327 = vld [vmem:[%s1 + $0x3b0] sm:$0xff]
        %v328 = vld [vmem:[%s1 + $0x3b8] sm:$0xff]
        %v329 = vld [vmem:[%s1 + $0x3c0] sm:$0xff]
        %v330 = vld [vmem:[%s1 + $0x3c8] sm:$0xff]
        %v331 = vld [vmem:[%s1 + $0x3d0] sm:$0xff]
        %v332 = vld [vmem:[%s1 + $0x3d8] sm:$0xff]
        %v333 = vld [vmem:[%s1 + $0x3e0] sm:$0xff]
        %v334 = vld [vmem:[%s1 + $0x3e8] sm:$0xff]
        %v335 = vld [vmem:[%s1 + $0x3f0] sm:$0xff]
        %v336 = vld [vmem:[%s1 + $0x3f8] sm:$0xff]
        %v337 = vld [vmem:[%s1 + $0x400] sm:$0xff]
        %v338 = vld [vmem:[%s1 + $0x408] sm:$0xff]
        %v339 = vld [vmem:[%s1 + $0x410] sm:$0xff]
        %v340 = vld [vmem:[%s1 + $0x418] sm:$0xff]
        %v341 = vld [vmem:[%s1 + $0x420] sm:$0xff]
        %v342 = vld [vmem:[%s1 + $0x428] sm:$0xff]
        %v343 = vld [vmem:[%s1 + $0x430] sm:$0xff]
        %v344 = vld [vmem:[%s1 + $0x438] sm:$0xff]
        %v345 = vld [vmem:[%s1 + $0x440] sm:$0xff]
        %v346 = vld [vmem:[%s1 + $0x448] sm:$0xff]
        %v347 = vld [vmem:[%s1 + $0x450] sm:$0xff]
        %v348 = vld [vmem:[%s1 + $0x458] sm:$0xff]
        %v349 = vld [vmem:[%s1 + $0x460] sm:$0xff]
        %v350 = vld [vmem:[%s1 + $0x468] sm:$0xff]
        %v351 = vld [vmem:[%s1 + $0x470] sm:$0xff]
        %v352 = vld [vmem:[%s1 + $0x478] sm:$0xff]
        %v353 = vld [vmem:[%s1 + $0x480] sm:$0xff]
        %v354 = vld [vmem:[%s1 + $0x488] sm:$0xff]
        %v355 = vld [vmem:[%s1 + $0x490] sm:$0xff]
        %v356 = vld [vmem:[%s1 + $0x498] sm:$0xff]
        %v357 = vld [vmem:[%s1 + $0x4a0] sm:$0xff]
        %v358 = vld [vmem:[%s1 + $0x4a8] sm:$0xff]
        %v359 = vld [vmem:[%s1 + $0x4b0] sm:$0xff]
        %v360 = vld [vmem:[%s1 + $0x4b8] sm:$0xff]
        %v361 = vld [vmem:[%s1 + $0x4c0] sm:$0xff]
        %v362 = vld [vmem:[%s1 + $0x4c8] sm:$0xff]
        %v363 = vld [vmem:[%s1 + $0x4d0] sm:$0xff]
        %v364 = vld [vmem:[%s1 + $0x4d8] sm:$0xff]
        %v365 = vld [vmem:[%s1 + $0x4e0] sm:$0xff]
        %v366 = vld [vmem:[%s1 + $0x4e8] sm:$0xff]
        %v367 = vld [vmem:[%s1 + $0x4f0] sm:$0xff]
        %v368 = vld [vmem:[%s1 + $0x4f8] sm:$0xff]
        %v369 = vld [vmem:[%s1 + $0x500] sm:$0xff]
        %v370 = vld [vmem:[%s1 + $0x508] sm:$0xff]
        %v371 = vld [vmem:[%s1 + $0x510] sm:$0xff]
        %v372 = vld [vmem:[%s1 + $0x518] sm:$0xff]
        %v373 = vld [vmem:[%s1 + $0x520] sm:$0xff]
        %v374 = vld [vmem:[%s1 + $0x528] sm:$0xff]
        %v375 = vld [vmem:[%s1 + $0x530] sm:$0xff]
        %v376 = vld [vmem:[%s1 + $0x538] sm:$0xff]
        %v377 = vld [vmem:[%s1 + $0x540] sm:$0xff]
        %v378 = vld [vmem:[%s1 + $0x548] sm:$0xff]
        %v379 = vld [vmem:[%s1 + $0x550] sm:$0xff]
        %v380 = vld [vmem:[%s1 + $0x558] sm:$0xff]
        %v381 = vld [vmem:[%s1 + $0x560] sm:$0xff]
        %v382 = vld [vmem:[%s1 + $0x568] sm:$0xff]
        %v383 = vld [vmem:[%s1 + $0x570] sm:$0xff]
        %v384 = vld [vmem:[%s1 + $0x578] sm:$0xff]
        %v385 = vld [vmem:[%s1 + $0x580] sm:$0xff]
        %v386 = vld [vmem:[%s1 + $0x588] sm:$0xff]
        %v387 = vld [vmem:[%s1 + $0x590] sm:$0xff]
        %v388 = vld [vmem:[%s1 + $0x598] sm:$0xff]
        %v389 = vld [vmem:[%s1 + $0x5a0] sm:$0xff]
        %v390 = vld [vmem:[%s1 + $0x5a8] sm:$0xff]
        %v391 = vld [vmem:[%s1 + $0x5b0] sm:$0xff]
        %v392 = vld [vmem:[%s1 + $0x5b8] sm:$0xff]
        %v393 = vld [vmem:[%s1 + $0x5c0] sm:$0xff]
        %v394 = vld [vmem:[%s1 + $0x5c8] sm:$0xff]
        %v395 = vld [vmem:[%s1 + $0x5d0] sm:$0xff]
        %v396 = vld [vmem:[%s1 + $0x5d8] sm:$0xff]
        %v397 = vld [vmem:[%s1 + $0x5e0] sm:$0xff]
        %v398 = vld [vmem:[%s1 + $0x5e8] sm:$0xff]
        %v399 = vld [vmem:[%s1 + $0x5f0] sm:$0xff]
        %v400 = vld [vmem:[%s1 + $0x5f8] sm:$0xff]
        %v401 = vpack.c.bf16 %v197, %v197
        %v402 = vpack.c.bf16 %v198, %v198
        %v403 = vpack.c.bf16 %v199, %v199
        %v404 = vpack.c.bf16 %v200, %v200
        %v405 = vpack.c.bf16 %v201, %v201
        %v406 = vpack.c.bf16 %v202, %v202
        %v407 = vpack.c.bf16 %v203, %v203
        %v408 = vpack.c.bf16 %v204, %v204
        %v409 = vpack.c.bf16 %v205, %v205
        %v410 = vpack.c.bf16 %v206, %v206
        %v411 = vpack.c.bf16 %v207, %v207
        %v412 = vpack.c.bf16 %v208, %v208
        %v413 = vpack.c.bf16 %v210, %v209
        %v414 = vpack.c.bf16 %v212, %v211
        %v415 = vpack.c.bf16 %v214, %v213
        %v416 = vpack.c.bf16 %v216, %v215
        %v417 = vpack.c.bf16 %v218, %v217
        %v418 = vpack.c.bf16 %v220, %v219
        %v419 = vpack.c.bf16 %v222, %v221
        %v420 = vpack.c.bf16 %v224, %v223
        %v421 = vpack.c.bf16 %v226, %v225
        %v422 = vpack.c.bf16 %v228, %v227
        %v423 = vpack.c.bf16 %v230, %v229
        %v424 = vpack.c.bf16 %v232, %v231
        %v425 = vpack.c.bf16 %v234, %v233
        %v426 = vpack.c.bf16 %v236, %v235
        %v427 = vpack.c.bf16 %v238, %v237
        %v428 = vpack.c.bf16 %v240, %v239
        %v429 = vpack.c.bf16 %v242, %v241
        %v430 = vpack.c.bf16 %v244, %v243
        %v431 = vpack.c.bf16 %v246, %v245
        %v432 = vpack.c.bf16 %v248, %v247
        %v433 = vpack.c.bf16 %v250, %v249
        %v434 = vpack.c.bf16 %v252, %v251
        %v435 = vpack.c.bf16 %v254, %v253
        %v436 = vpack.c.bf16 %v256, %v255
        %v437 = vpack.c.bf16 %v258, %v257
        %v438 = vpack.c.bf16 %v260, %v259
        %v439 = vpack.c.bf16 %v262, %v261
        %v440 = vpack.c.bf16 %v264, %v263
        %v441 = vpack.c.bf16 %v266, %v265
        %v442 = vpack.c.bf16 %v268, %v267
        %v443 = vpack.c.bf16 %v270, %v269
        %v444 = vpack.c.bf16 %v272, %v271
        %v445 = vpack.c.bf16 %v274, %v273
        %v446 = vpack.c.bf16 %v276, %v275
        %v447 = vpack.c.bf16 %v278, %v277
        %v448 = vpack.c.bf16 %v280, %v279
        %v449 = vpack.c.bf16 %v282, %v281
        %v450 = vpack.c.bf16 %v284, %v283
        %v451 = vpack.c.bf16 %v286, %v285
        %v452 = vpack.c.bf16 %v288, %v287
        %v453 = vpack.c.bf16 %v290, %v289
        %v454 = vpack.c.bf16 %v292, %v291
        %v455 = vpack.c.bf16 %v294, %v293
        %v456 = vpack.c.bf16 %v296, %v295
        %v457 = vpack.c.bf16 %v298, %v297
        %v458 = vpack.c.bf16 %v300, %v299
        %v459 = vpack.c.bf16 %v302, %v301
        %v460 = vpack.c.bf16 %v304, %v303
        %v461 = vpack.c.bf16 %v306, %v305
        %v462 = vpack.c.bf16 %v308, %v307
        %v463 = vpack.c.bf16 %v310, %v309
        %v464 = vpack.c.bf16 %v312, %v311
        %v465 = vpack.c.bf16 %v314, %v313
        %v466 = vpack.c.bf16 %v316, %v315
        %v467 = vpack.c.bf16 %v318, %v317
        %v468 = vpack.c.bf16 %v320, %v319
        %v469 = vpack.c.bf16 %v322, %v321
        %v470 = vpack.c.bf16 %v324, %v323
        %v471 = vpack.c.bf16 %v326, %v325
        %v472 = vpack.c.bf16 %v328, %v327
        %v473 = vpack.c.bf16 %v330, %v329
        %v474 = vpack.c.bf16 %v332, %v331
        %v475 = vpack.c.bf16 %v334, %v333
        %v476 = vpack.c.bf16 %v336, %v335
        %v477 = vpack.c.bf16 %v338, %v337
        %v478 = vpack.c.bf16 %v340, %v339
        %v479 = vpack.c.bf16 %v342, %v341
        %v480 = vpack.c.bf16 %v344, %v343
        %v481 = vpack.c.bf16 %v346, %v345
        %v482 = vpack.c.bf16 %v348, %v347
        %v483 = vpack.c.bf16 %v350, %v349
        %v484 = vpack.c.bf16 %v352, %v351
        %v485 = vpack.c.bf16 %v354, %v353
        %v486 = vpack.c.bf16 %v356, %v355
        %v487 = vpack.c.bf16 %v358, %v357
        %v488 = vpack.c.bf16 %v360, %v359
        %v489 = vpack.c.bf16 %v362, %v361
        %v490 = vpack.c.bf16 %v364, %v363
        %v491 = vpack.c.bf16 %v366, %v365
        %v492 = vpack.c.bf16 %v368, %v367
        %v493 = vpack.c.bf16 %v370, %v369
        %v494 = vpack.c.bf16 %v372, %v371
        %v495 = vpack.c.bf16 %v374, %v373
        %v496 = vpack.c.bf16 %v376, %v375
        %v497 = vpack.c.bf16 %v378, %v377
        %v498 = vpack.c.bf16 %v380, %v379
        %v499 = vpack.c.bf16 %v382, %v381
        %v500 = vpack.c.bf16 %v384, %v383
        %v501 = vpack.c.bf16 %v386, %v385
        %v502 = vpack.c.bf16 %v388, %v387
        %v503 = vpack.c.bf16 %v390, %v389
        %v504 = vpack.c.bf16 %v392, %v391
        %v505 = vpack.c.bf16 %v394, %v393
        %v506 = vpack.c.bf16 %v396, %v395
        %v507 = vpack.c.bf16 %v398, %v397
        %v508 = vpack.c.bf16 %v400, %v399
        %v509 = vld [vmem:[%s2] sm:$0x1]
        %v511 = vlaneseq
        %v512 = vshrl.u32 %v511, 7
        %v513 = vsub.s32 0, %v512
        %v514 = vrot.slane %v509, %v513
        %516 = vmatprep.subr.bf16.mxu0 0
        %517 = vmatpush1.bf16.msra.mxu0 %v413
        %518 = vmatprep.subr.bf16.mxu0 0
        %519 = vmatpush1.bf16.msra.mxu0 %v414
        %520 = vmatprep.subr.bf16.mxu0 0
        %521 = vmatpush1.bf16.msra.mxu0 %v415
        %522 = vmatprep.subr.bf16.mxu0 0
        %523 = vmatpush1.bf16.msra.mxu0 %v416
        %524 = vmatprep.subr.bf16.mxu0 0
        %525 = vmatpush1.bf16.msra.mxu0 %v417
        %526 = vmatprep.subr.bf16.mxu0 0
        %527 = vmatpush1.bf16.msra.mxu0 %v418
        %528 = vmatprep.subr.bf16.mxu0 0
        %529 = vmatpush1.bf16.msra.mxu0 %v419
        %530 = vmatprep.subr.bf16.mxu0 0
        %531 = vmatpush1.bf16.msra.mxu0 %v420
        %532 = vmatprep.subr.bf16.mxu0 0
        %533 = vmatpush1.bf16.msra.mxu0 %v421
        %534 = vmatprep.subr.bf16.mxu0 0
        %535 = vmatpush1.bf16.msra.mxu0 %v422
        %536 = vmatprep.subr.bf16.mxu0 0
        %537 = vmatpush1.bf16.msra.mxu0 %v423
        %538 = vmatprep.subr.bf16.mxu0 0
        %539 = vmatpush1.bf16.msra.mxu0 %v424
        %540 = vmatprep.subr.bf16.mxu0 0
        %541 = vmatpush1.bf16.msra.mxu0 %v425
        %542 = vmatprep.subr.bf16.mxu0 0
        %543 = vmatpush1.bf16.msra.mxu0 %v426
        %544 = vmatprep.subr.bf16.mxu0 0
        %545 = vmatpush1.bf16.msra.mxu0 %v427
        %546 = vmatprep.subr.bf16.mxu0 0
        %547 = vmatpush1.bf16.msra.mxu0 %v428
        %548 = vmatprep.mubr.bf16.mxu0 %v402
        %549 = vmatmul.mubr.bf16.gmra.mrb[0].mxu0 %v401
        %v550 = vpop.f32.mrb[0].mxu0
        %v551 = vadd.f32 %v514, %v550
        %v552 = vpop.f32.mrb[0].mxu0
        %v553 = vpop.f32.mrb[0].mxu0
        %v554 = vpop.f32.mrb[0].mxu0
        %555 = vdwg.mxu0
        %556 = vmatprep.subr.bf16.mxu0 0
        %557 = vmatpush1.bf16.msra.mxu0 %v429
        %558 = vmatprep.subr.bf16.mxu0 0
        %559 = vmatpush1.bf16.msra.mxu0 %v430
        %560 = vmatprep.subr.bf16.mxu0 0
        %561 = vmatpush1.bf16.msra.mxu0 %v431
        %562 = vmatprep.subr.bf16.mxu0 0
        %563 = vmatpush1.bf16.msra.mxu0 %v432
        %564 = vmatprep.subr.bf16.mxu0 0
        %565 = vmatpush1.bf16.msra.mxu0 %v433
        %566 = vmatprep.subr.bf16.mxu0 0
        %567 = vmatpush1.bf16.msra.mxu0 %v434
        %568 = vmatprep.subr.bf16.mxu0 0
        %569 = vmatpush1.bf16.msra.mxu0 %v435
        %570 = vmatprep.subr.bf16.mxu0 0
        %571 = vmatpush1.bf16.msra.mxu0 %v436
        %572 = vmatprep.subr.bf16.mxu0 0
        %573 = vmatpush1.bf16.msra.mxu0 %v437
        %574 = vmatprep.subr.bf16.mxu0 0
        %575 = vmatpush1.bf16.msra.mxu0 %v438
        %576 = vmatprep.subr.bf16.mxu0 0
        %577 = vmatpush1.bf16.msra.mxu0 %v439
        %578 = vmatprep.subr.bf16.mxu0 0
        %579 = vmatpush1.bf16.msra.mxu0 %v440
        %580 = vmatprep.subr.bf16.mxu0 0
        %581 = vmatpush1.bf16.msra.mxu0 %v441
        %582 = vmatprep.subr.bf16.mxu0 0
        %583 = vmatpush1.bf16.msra.mxu0 %v442
        %584 = vmatprep.subr.bf16.mxu0 0
        %585 = vmatpush1.bf16.msra.mxu0 %v443
        %586 = vmatprep.subr.bf16.mxu0 0
        %587 = vmatpush1.bf16.msra.mxu0 %v444
        %588 = vmatprep.mubr.bf16.mxu0 %v404
        %589 = vmatmul.mubr.bf16.gmra.mrb[0].mxu0 %v403
        %v590 = vpop.f32.mrb[0].mxu0
        %v591 = vadd.f32 %v551, %v590
        %v592 = vpop.f32.mrb[0].mxu0
        %v593 = vpop.f32.mrb[0].mxu0
        %v594 = vpop.f32.mrb[0].mxu0
        %595 = vdwg.mxu0
        %596 = vmatprep.subr.bf16.mxu0 0
        %597 = vmatpush1.bf16.msra.mxu0 %v445
        %598 = vmatprep.subr.bf16.mxu0 0
        %599 = vmatpush1.bf16.msra.mxu0 %v446
        %600 = vmatprep.subr.bf16.mxu0 0
        %601 = vmatpush1.bf16.msra.mxu0 %v447
        %602 = vmatprep.subr.bf16.mxu0 0
        %603 = vmatpush1.bf16.msra.mxu0 %v448
        %604 = vmatprep.subr.bf16.mxu0 0
        %605 = vmatpush1.bf16.msra.mxu0 %v449
        %606 = vmatprep.subr.bf16.mxu0 0
        %607 = vmatpush1.bf16.msra.mxu0 %v450
        %608 = vmatprep.subr.bf16.mxu0 0
        %609 = vmatpush1.bf16.msra.mxu0 %v451
        %610 = vmatprep.subr.bf16.mxu0 0
        %611 = vmatpush1.bf16.msra.mxu0 %v452
        %612 = vmatprep.subr.bf16.mxu0 0
        %613 = vmatpush1.bf16.msra.mxu0 %v453
        %614 = vmatprep.subr.bf16.mxu0 0
        %615 = vmatpush1.bf16.msra.mxu0 %v454
        %616 = vmatprep.subr.bf16.mxu0 0
        %617 = vmatpush1.bf16.msra.mxu0 %v455
        %618 = vmatprep.subr.bf16.mxu0 0
        %619 = vmatpush1.bf16.msra.mxu0 %v456
        %620 = vmatprep.subr.bf16.mxu0 0
        %621 = vmatpush1.bf16.msra.mxu0 %v457
        %622 = vmatprep.subr.bf16.mxu0 0
        %623 = vmatpush1.bf16.msra.mxu0 %v458
        %624 = vmatprep.subr.bf16.mxu0 0
        %625 = vmatpush1.bf16.msra.mxu0 %v459
        %626 = vmatprep.subr.bf16.mxu0 0
        %627 = vmatpush1.bf16.msra.mxu0 %v460
        %628 = vmatprep.mubr.bf16.mxu0 %v406
        %629 = vmatmul.mubr.bf16.gmra.mrb[0].mxu0 %v405
        %v630 = vpop.f32.mrb[0].mxu0
        %v631 = vadd.f32 %v591, %v630
        %v632 = vpop.f32.mrb[0].mxu0
        %v633 = vpop.f32.mrb[0].mxu0
        %v634 = vpop.f32.mrb[0].mxu0
        %635 = vdwg.mxu0
        %636 = vmatprep.subr.bf16.mxu0 0
        %637 = vmatpush1.bf16.msra.mxu0 %v461
        %638 = vmatprep.subr.bf16.mxu0 0
        %639 = vmatpush1.bf16.msra.mxu0 %v462
        %640 = vmatprep.subr.bf16.mxu0 0
        %641 = vmatpush1.bf16.msra.mxu0 %v463
        %642 = vmatprep.subr.bf16.mxu0 0
        %643 = vmatpush1.bf16.msra.mxu0 %v464
        %644 = vmatprep.subr.bf16.mxu0 0
        %645 = vmatpush1.bf16.msra.mxu0 %v465
        %646 = vmatprep.subr.bf16.mxu0 0
        %647 = vmatpush1.bf16.msra.mxu0 %v466
        %648 = vmatprep.subr.bf16.mxu0 0
        %649 = vmatpush1.bf16.msra.mxu0 %v467
        %650 = vmatprep.subr.bf16.mxu0 0
        %651 = vmatpush1.bf16.msra.mxu0 %v468
        %652 = vmatprep.subr.bf16.mxu0 0
        %653 = vmatpush1.bf16.msra.mxu0 %v469
        %654 = vmatprep.subr.bf16.mxu0 0
        %655 = vmatpush1.bf16.msra.mxu0 %v470
        %656 = vmatprep.subr.bf16.mxu0 0
        %657 = vmatpush1.bf16.msra.mxu0 %v471
        %658 = vmatprep.subr.bf16.mxu0 0
        %659 = vmatpush1.bf16.msra.mxu0 %v472
        %660 = vmatprep.subr.bf16.mxu0 0
        %661 = vmatpush1.bf16.msra.mxu0 %v473
        %662 = vmatprep.subr.bf16.mxu0 0
        %663 = vmatpush1.bf16.msra.mxu0 %v474
        %664 = vmatprep.subr.bf16.mxu0 0
        %665 = vmatpush1.bf16.msra.mxu0 %v475
        %666 = vmatprep.subr.bf16.mxu0 0
        %667 = vmatpush1.bf16.msra.mxu0 %v476
        %668 = vmatprep.mubr.bf16.mxu0 %v408
        %669 = vmatmul.mubr.bf16.gmra.mrb[0].mxu0 %v407
        %v670 = vpop.f32.mrb[0].mxu0
        %v671 = vadd.f32 %v631, %v670
        %v672 = vpop.f32.mrb[0].mxu0
        %v673 = vpop.f32.mrb[0].mxu0
        %v674 = vpop.f32.mrb[0].mxu0
        %675 = vdwg.mxu0
        %676 = vmatprep.subr.bf16.mxu0 0
        %677 = vmatpush1.bf16.msra.mxu0 %v477
        %678 = vmatprep.subr.bf16.mxu0 0
        %679 = vmatpush1.bf16.msra.mxu0 %v478
        %680 = vmatprep.subr.bf16.mxu0 0
        %681 = vmatpush1.bf16.msra.mxu0 %v479
        %682 = vmatprep.subr.bf16.mxu0 0
        %683 = vmatpush1.bf16.msra.mxu0 %v480
        %684 = vmatprep.subr.bf16.mxu0 0
        %685 = vmatpush1.bf16.msra.mxu0 %v481
        %686 = vmatprep.subr.bf16.mxu0 0
        %687 = vmatpush1.bf16.msra.mxu0 %v482
        %688 = vmatprep.subr.bf16.mxu0 0
        %689 = vmatpush1.bf16.msra.mxu0 %v483
        %690 = vmatprep.subr.bf16.mxu0 0
        %691 = vmatpush1.bf16.msra.mxu0 %v484
        %692 = vmatprep.subr.bf16.mxu0 0
        %693 = vmatpush1.bf16.msra.mxu0 %v485
        %694 = vmatprep.subr.bf16.mxu0 0
        %695 = vmatpush1.bf16.msra.mxu0 %v486
        %696 = vmatprep.subr.bf16.mxu0 0
        %697 = vmatpush1.bf16.msra.mxu0 %v487
        %698 = vmatprep.subr.bf16.mxu0 0
        %699 = vmatpush1.bf16.msra.mxu0 %v488
        %700 = vmatprep.subr.bf16.mxu0 0
        %701 = vmatpush1.bf16.msra.mxu0 %v489
        %702 = vmatprep.subr.bf16.mxu0 0
        %703 = vmatpush1.bf16.msra.mxu0 %v490
        %704 = vmatprep.subr.bf16.mxu0 0
        %705 = vmatpush1.bf16.msra.mxu0 %v491
        %706 = vmatprep.subr.bf16.mxu0 0
        %707 = vmatpush1.bf16.msra.mxu0 %v492
        %708 = vmatprep.mubr.bf16.mxu0 %v410
        %709 = vmatmul.mubr.bf16.gmra.mrb[0].mxu0 %v409
        %v710 = vpop.f32.mrb[0].mxu0
        %v711 = vadd.f32 %v671, %v710
        %v712 = vpop.f32.mrb[0].mxu0
        %v713 = vpop.f32.mrb[0].mxu0
        %v714 = vpop.f32.mrb[0].mxu0
        %715 = vdwg.mxu0
        %716 = vmatprep.subr.bf16.mxu0 0
        %717 = vmatpush1.bf16.msra.mxu0 %v493
        %718 = vmatprep.subr.bf16.mxu0 0
        %719 = vmatpush1.bf16.msra.mxu0 %v494
        %720 = vmatprep.subr.bf16.mxu0 0
        %721 = vmatpush1.bf16.msra.mxu0 %v495
        %722 = vmatprep.subr.bf16.mxu0 0
        %723 = vmatpush1.bf16.msra.mxu0 %v496
        %724 = vmatprep.subr.bf16.mxu0 0
        %725 = vmatpush1.bf16.msra.mxu0 %v497
        %726 = vmatprep.subr.bf16.mxu0 0
        %727 = vmatpush1.bf16.msra.mxu0 %v498
        %728 = vmatprep.subr.bf16.mxu0 0
        %729 = vmatpush1.bf16.msra.mxu0 %v499
        %730 = vmatprep.subr.bf16.mxu0 0
        %731 = vmatpush1.bf16.msra.mxu0 %v500
        %732 = vmatprep.subr.bf16.mxu0 0
        %733 = vmatpush1.bf16.msra.mxu0 %v501
        %734 = vmatprep.subr.bf16.mxu0 0
        %735 = vmatpush1.bf16.msra.mxu0 %v502
        %736 = vmatprep.subr.bf16.mxu0 0
        %737 = vmatpush1.bf16.msra.mxu0 %v503
        %738 = vmatprep.subr.bf16.mxu0 0
        %739 = vmatpush1.bf16.msra.mxu0 %v504
        %740 = vmatprep.subr.bf16.mxu0 0
        %741 = vmatpush1.bf16.msra.mxu0 %v505
        %742 = vmatprep.subr.bf16.mxu0 0
        %743 = vmatpush1.bf16.msra.mxu0 %v506
        %744 = vmatprep.subr.bf16.mxu0 0
        %745 = vmatpush1.bf16.msra.mxu0 %v507
        %746 = vmatprep.subr.bf16.mxu0 0
        %747 = vmatpush1.bf16.msra.mxu0 %v508
        %748 = vmatprep.mubr.bf16.mxu0 %v412
        %749 = vmatmul.mubr.bf16.gmra.mrb[0].mxu0 %v411
        %v750 = vpop.f32.mrb[0].mxu0
        %v751 = vadd.f32 %v711, %v750
        %v752 = vpop.f32.mrb[0].mxu0
        %v753 = vpop.f32.mrb[0].mxu0
        %v754 = vpop.f32.mrb[0].mxu0
        %755 = vdwg.mxu0
        %v756 = vld [vmem:[%s3] sm:$0xff]
        %v757 = vadd.f32 %v751, %v756
        %vm758 = vcmask 392192
        %759 = vst.msk [vmem:[%s190] sm:$0xff] %vm758, %v757
        %s760 = sand.u32 %s115, 1
        %s761 = scalar_lea.sflag [#allocation3], %s760
        %s762 = sand.u32 %s115, 1
        %s763 = smul.addr %s762, 8
        %s764 = scalar_lea.vmem [#allocation2], %s763
        // Predicated region
        $region37: #{tpu_custom_call.1} parent=35 // pred_check
          %p765 = pneg %p125
        $region38: #{tpu_custom_call.1} parent=35 // pred_check_branch
          %767 = sbr.rel (%p765) target = $region40
        $region39: #{tpu_custom_call.1} parent=35 // pred_region
          %s769 = ssub.s32 128, 128
          %770 = vsyncadd %s761, %s769
          %s771 = smul.addr %s18, 128
          %s772 = scalar_lea.hbm %s4, %s771
          %s774 = sshll.u32 %s764, 4
          %s775 = int_to_ptr.vmem [resolvable:$true] %s774
          %777 = dma.vmem_to_hbm [thread:$0]  %s775, 128, %s772, %s761
        $region40: #{tpu_custom_call.1} parent=35 // pred_fallthru
          _
      $region36: #{tpu_custom_call.1} parent=5 // pred_fallthru
        _
      %p778 = scmp.le.s32.totalorder 2, %s13
      // Predicated region
      $region41: #{tpu_custom_call.1} parent=5 // pred_check
        %p779 = pneg %p778
      $region42: #{tpu_custom_call.1} parent=5 // pred_check_branch
        %781 = sbr.rel (%p779) target = $region44
      $region43: #{tpu_custom_call.1} parent=5 // pred_region
        %s782 = ssub.s32 %s13, 2
        // Predicated region
        $region45: #{tpu_custom_call.1} parent=43 // pred_check
          %p783 = pneg %p131
        $region46: #{tpu_custom_call.1} parent=43 // pred_check_branch
          %785 = sbr.rel (%p783) target = $region48
        $region47: #{tpu_custom_call.1} parent=43 // pred_region
          %s786 = sand.u32 %s116, 1
          %s787 = scalar_lea.sflag [#allocation3], %s786
          %s788 = sand.u32 %s116, 1
          %s789 = smul.addr %s788, 8
          %s790 = scalar_lea.vmem [#allocation2], %s789
          %791 = dma.done %s787, 128
        $region48: #{tpu_custom_call.1} parent=43 // pred_fallthru
          _
      $region44: #{tpu_custom_call.1} parent=5 // pred_fallthru
        _
    $region6: #{tpu_custom_call.1} parent=1 // loop_footer
      %s17 = sadd.s32 1, %s13
    $region7: #{tpu_custom_call.1} parent=1 // loop_footer_branch
      %12 = sbr.rel target = $region3
    $region8: #{tpu_custom_call.1} parent=1 // loop_exit
      _
    %792 = vsyncpa [#allocation3], 1
    %s793 = scalar_lea.sflag [#allocation3], 1
    %794 = vsyncpa %s793, 1

</llo_original>
